<compile_context>
chip_gen: v7x
topology: tpu7x:2x2x1
jax: 0.10.0
libtpu: 0.0.40
codegen_flags: <defaults>
</compile_context>

<pallas_src>
import math

import jax
import jax.numpy as jnp
from jax.experimental import pallas as pl
from jax.experimental.pallas import tpu as pltpu

_INV_SQRT2 = 1.0 / math.sqrt(2.0)
_SQRT_2_OVER_PI = math.sqrt(2.0 / math.pi)
_LN_EPS = 1e-12


# ------------------------------- kernel --------------------------------------
def _make_transform_kernel(approx_gelu: bool):
    def transform_kernel(x_ref, w_ref, b_ref, g_ref, beta_ref, o_ref):
        # MXU wants bf16 operands: weight is already bf16 (cast once in the
        # wrapper); cast the streamed x tile here.  Accumulate in f32.
        x = x_ref[...].astype(jnp.bfloat16)
        w = w_ref[...].astype(jnp.bfloat16)          # no-op if already bf16
        h = jnp.dot(x, w, preferred_element_type=jnp.float32)
        h = h + b_ref[...]                           # bias kept f32

        if approx_gelu:
            # tanh-approximate GELU: tanh is a real EUP instruction.
            inner = jnp.float32(_SQRT_2_OVER_PI) * (h + 0.044715 * h * h * h)
            h = 0.5 * h * (1.0 + jnp.tanh(inner))
        else:
            # Exact erf-GELU (matches the reference module).  erf lowers to a
            # VPU polynomial, not an EUP op — this is the likely binding slot
            # after the bf16 matmul fix on v6e/v7x.
            h = 0.5 * h * (1.0 + jax.lax.erf(h * jnp.float32(_INV_SQRT2)))

        # BertLayerNorm: biased variance over the last dim, eps=1e-12.
        # Two-pass form (numerically safe), with (h - u) hoisted and reused.
        u = jnp.mean(h, axis=-1, keepdims=True)
        hc = h - u
        var = jnp.mean(hc * hc, axis=-1, keepdims=True)
        hn = hc * jax.lax.rsqrt(var + jnp.float32(_LN_EPS))
        o_ref[...] = (g_ref[...] * hn + beta_ref[...]).astype(o_ref.dtype)

    return transform_kernel


# --------------------------- one-time param prep ------------------------------
def prepare_transform_params(params, compute_dtype=jnp.bfloat16):
    """Call ONCE outside the per-step path: transpose nn.Linear's [out,in]
    weight to [in,out] and cast it to the MXU dtype; reshape the 1-D params."""
    H = params["dense_weight"].shape[0]
    return {
        "w_t": jnp.asarray(params["dense_weight"].T, compute_dtype),   # [H_in, H_out]
        "bias": jnp.asarray(params["dense_bias"], jnp.float32).reshape(1, H),
        "gamma": jnp.asarray(params["ln_gamma"], jnp.float32).reshape(1, H),
        "beta": jnp.asarray(params["ln_beta"], jnp.float32).reshape(1, H),
    }


# ------------------------------- wrapper --------------------------------------
def bert_prediction_head_transform(hidden_states, prepared, *, tm=512,
                                   approx_gelu=False):
    """hidden_states: [B, S, H] -> [B, S, H], matching the PyTorch module.

    `prepared` comes from prepare_transform_params() (weight already
    transposed + cast), so no per-call transpose/cast ops are emitted."""
    B, S, H = hidden_states.shape
    M = B * S
    x2d = hidden_states.reshape(M, H)

    w = prepared["w_t"]
    b = prepared["bias"]
    g = prepared["gamma"]
    beta = prepared["beta"]
    assert w.shape == (H, H)

    # Row tile: large (multiple of 8 sublanes), but capped so the single
    # "parallel" grid axis keeps >= 2 steps when possible (v7x: 2 TCs/chip).
    m_units = pl.cdiv(M, 8)                         # number of 8-row groups
    max_tm = max(8, pl.cdiv(m_units, 2) * 8)        # keeps grid_m >= 2 if M > 8
    tm_eff = max(8, (min(tm, max_tm) // 8) * 8)
    grid_m = pl.cdiv(M, tm_eff)                     # ragged last block is fine:
                                                    # OOB output rows are clipped.

    x_bytes = x2d.dtype.itemsize
    out_bytes = jnp.dtype(hidden_states.dtype).itemsize
    w_bytes = jnp.dtype(w.dtype).itemsize

    # Explicit VMEM budget: double-buffered x/out tiles + single weight copy
    # + small constants + headroom for the f32 intermediates (h, hc, hn, ...).
    vmem_budget = (
        2 * tm_eff * H * x_bytes
        + 2 * tm_eff * H * out_bytes
        + 1 * H * H * w_bytes
        + 2 * 3 * H * 4
        + 6 * tm_eff * H * 4
        + (4 << 20)
    )
    vmem_limit = int(min(max(vmem_budget, 32 << 20), 64 << 20))

    cost = pl.CostEstimate(
        flops=2 * M * H * H + 10 * M * H,
        transcendentals=M * H,
        bytes_accessed=M * H * (x_bytes + out_bytes) + H * H * w_bytes + 3 * H * 4,
    )

    out2d = pl.pallas_call(
        _make_transform_kernel(approx_gelu),
        out_shape=jax.ShapeDtypeStruct((M, H), hidden_states.dtype),
        grid_spec=pltpu.PrefetchScalarGridSpec(
            num_scalar_prefetch=0,
            grid=(grid_m,),
            in_specs=[
                # x rows: streamed, double-buffered by default.
                pl.BlockSpec((tm_eff, H), lambda i: (i, 0)),
                # dense weight: constant index map -> resident; single-buffered.
                pl.BlockSpec((H, H), lambda i: (0, 0),
                             pipeline_mode=pl.Buffered(1)),
                pl.BlockSpec((1, H), lambda i: (0, 0)),   # dense bias
                pl.BlockSpec((1, H), lambda i: (0, 0)),   # LN gamma
                pl.BlockSpec((1, H), lambda i: (0, 0)),   # LN beta
            ],
            out_specs=pl.BlockSpec((tm_eff, H), lambda i: (i, 0)),
        ),
        compiler_params=pltpu.CompilerParams(
            dimension_semantics=("parallel",),     # rows independent -> 2 TCs on v7x
            vmem_limit_bytes=vmem_limit,
        ),
        cost_estimate=cost,
    )(x2d, w, b, g, beta)

    return out2d.reshape(B, S, H)


# --------------------------- pure-JAX references ------------------------------
def reference_f32(hidden_states, params):
    """Exact f32 math of the PyTorch module."""
    h = hidden_states @ params["dense_weight"].T + params["dense_bias"]
    h = 0.5 * h * (1.0 + jax.lax.erf(h * jnp.float32(_INV_SQRT2)))
    u = jnp.mean(h, axis=-1, keepdims=True)
    s = jnp.mean((h - u) ** 2, axis=-1, keepdims=True)
    h = (h - u) / jnp.sqrt(s + _LN_EPS)
    return params["ln_gamma"] * h + params["ln_beta"]


def reference_bf16_matmul(hidden_states, params):
    """Same math as the kernel: bf16 MXU operands, f32 accumulate / epilogue."""
    B, S, H = hidden_states.shape
    x = hidden_states.reshape(-1, H).astype(jnp.bfloat16)
    w = params["dense_weight"].T.astype(jnp.bfloat16)
    h = jnp.dot(x, w, preferred_element_type=jnp.float32) + params["dense_bias"]
    h = 0.5 * h * (1.0 + jax.lax.erf(h * jnp.float32(_INV_SQRT2)))
    u = jnp.mean(h, axis=-1, keepdims=True)
    hc = h - u
    var = jnp.mean(hc * hc, axis=-1, keepdims=True)
    h = hc * jax.lax.rsqrt(var + jnp.float32(_LN_EPS))
    return (params["ln_gamma"] * h + params["ln_beta"]).reshape(B, S, H)


if __name__ == "__main__":
    # Small config consistent with the module's forward: [batch, seq_len, hidden]
    B, S, H = 2, 8, 32

    key = jax.random.PRNGKey(0)
    ks = jax.random.split(key, 5)
    params = {
        # nn.Linear(H, H): weight [out, in], bias [out]
        "dense_weight": 0.02 * jax.random.normal(ks[0], (H, H), jnp.float32),
        "dense_bias": 0.02 * jax.random.normal(ks[1], (H,), jnp.float32),
        # BertLayerNorm(H, eps=1e-12)
        "ln_gamma": 1.0 + 0.01 * jax.random.normal(ks[2], (H,), jnp.float32),
        "ln_beta": 0.01 * jax.random.normal(ks[3], (H,), jnp.float32),
    }
    hidden_states = jax.random.normal(ks[4], (B, S, H), jnp.float32)

    # One-time prep (transpose + bf16 cast of the dense weight).
    prepared = prepare_transform_params(params)

    out = bert_prediction_head_transform(hidden_states, prepared)
    jax.block_until_ready(out)
    assert out.shape == (B, S, H)

    # Matched-math check (bf16 MXU operands, f32 accumulation / epilogue).
    ref_match = reference_bf16_matmul(hidden_states, params)
    assert jnp.allclose(out, ref_match, atol=1e-3, rtol=1e-3), (
        "mismatch vs bf16-matmul reference: "
        f"{float(jnp.max(jnp.abs(out - ref_match)))}")

    # Looser sanity check against the exact f32 module math (bf16 rounding).
    ref_f32 = reference_f32(hidden_states, params)
    assert jnp.allclose(out, ref_f32, atol=5e-2, rtol=5e-2), (
        "mismatch vs f32 reference: "
        f"{float(jnp.max(jnp.abs(out - ref_f32)))}")

    print("KERNEL_OK")
</pallas_src>

<mosaic_0001>
module attributes {stable_mosaic.version = 11 : i64} {
  func.func @transform_kernel(%arg0: i32, %arg1: memref<8x32xf32, #tpu.memory_space<vmem>>, %arg2: memref<32x32xbf16, #tpu.memory_space<vmem>>, %arg3: memref<1x32xf32, #tpu.memory_space<vmem>>, %arg4: memref<1x32xf32, #tpu.memory_space<vmem>>, %arg5: memref<1x32xf32, #tpu.memory_space<vmem>>, %arg6: memref<8x32xf32, #tpu.memory_space<vmem>>) attributes {dimension_semantics = [#tpu.dimension_semantics<parallel>], iteration_bounds = array<i64: 2>, scalar_prefetch = 0 : i64, scratch_operands = 0 : i64, tpu.core_type = #tpu.core_type<tc>, window_params = [{transform_indices = @transform_0, window_bounds = array<i64: 8, 32>}, {pipeline_mode = #tpu.pipeline_mode<synchronous>, transform_indices = @transform_1, window_bounds = array<i64: 32, 32>}, {pipeline_mode = #tpu.pipeline_mode<synchronous>, transform_indices = @transform_2, window_bounds = array<i64: 1, 32>}, {pipeline_mode = #tpu.pipeline_mode<synchronous>, transform_indices = @transform_3, window_bounds = array<i64: 1, 32>}, {pipeline_mode = #tpu.pipeline_mode<synchronous>, transform_indices = @transform_4, window_bounds = array<i64: 1, 32>}, {transform_indices = @transform_5, window_bounds = array<i64: 8, 32>}]} {
    %c0 = arith.constant 0 : index
    %c0_0 = arith.constant 0 : index
    %0 = vector.load %arg1[%c0, %c0_0] : memref<8x32xf32, #tpu.memory_space<vmem>>, vector<8x32xf32>
    %1 = arith.truncf %0 : vector<8x32xf32> to vector<8x32xbf16>
    %c0_1 = arith.constant 0 : index
    %c0_2 = arith.constant 0 : index
    %2 = vector.load %arg2[%c0_1, %c0_2] : memref<32x32xbf16, #tpu.memory_space<vmem>>, vector<32x32xbf16>
    %cst = arith.constant dense<0.000000e+00> : vector<8x32xf32>
    %3 = tpu.matmul %1, %2, %cst {dimension_numbers = #tpu.dot_dimension_numbers<[1], [0], [0], [1], [0, 0, 1, 1], [], []>} : vector<8x32xbf16>, vector<32x32xbf16>, vector<8x32xf32> -> vector<8x32xf32>
    %c0_3 = arith.constant 0 : index
    %c0_4 = arith.constant 0 : index
    %4 = vector.load %arg3[%c0_3, %c0_4] : memref<1x32xf32, #tpu.memory_space<vmem>>, vector<1x32xf32>
    %5 = vector.broadcast %4 : vector<1x32xf32> to vector<8x32xf32>
    %6 = arith.addf %3, %5 : vector<8x32xf32>
    %cst_5 = arith.constant 5.000000e-01 : f32
    %7 = vector.broadcast %cst_5 : f32 to vector<8x32xf32>
    %8 = arith.mulf %7, %6 : vector<8x32xf32>
    %cst_6 = arith.constant 0.707106769 : f32
    %9 = vector.broadcast %cst_6 : f32 to vector<8x32xf32>
    %10 = arith.mulf %6, %9 : vector<8x32xf32>
    %11 = math.erf %10 : vector<8x32xf32>
    %cst_7 = arith.constant 1.000000e+00 : f32
    %12 = vector.broadcast %cst_7 : f32 to vector<8x32xf32>
    %13 = arith.addf %12, %11 : vector<8x32xf32>
    %14 = arith.mulf %8, %13 : vector<8x32xf32>
    %cst_8 = arith.constant dense<0.000000e+00> : vector<8xf32>
    %15 = vector.multi_reduction <add>, %14, %cst_8 [1] : vector<8x32xf32> to vector<8xf32>
    %16 = vector.shape_cast %15 : vector<8xf32> to vector<8x1xf32>
    %cst_9 = arith.constant 3.200000e+01 : f32
    %17 = vector.broadcast %cst_9 : f32 to vector<8x1xf32>
    %18 = arith.divf %16, %17 : vector<8x1xf32>
    %19 = vector.broadcast %18 : vector<8x1xf32> to vector<8x32xf32>
    %20 = arith.subf %14, %19 : vector<8x32xf32>
    %21 = arith.mulf %20, %20 : vector<8x32xf32>
    %cst_10 = arith.constant dense<0.000000e+00> : vector<8xf32>
    %22 = vector.multi_reduction <add>, %21, %cst_10 [1] : vector<8x32xf32> to vector<8xf32>
    %23 = vector.shape_cast %22 : vector<8xf32> to vector<8x1xf32>
    %cst_11 = arith.constant 3.200000e+01 : f32
    %24 = vector.broadcast %cst_11 : f32 to vector<8x1xf32>
    %25 = arith.divf %23, %24 : vector<8x1xf32>
    %cst_12 = arith.constant 9.99999996E-13 : f32
    %26 = vector.broadcast %cst_12 : f32 to vector<8x1xf32>
    %27 = arith.addf %25, %26 : vector<8x1xf32>
    %28 = math.rsqrt %27 : vector<8x1xf32>
    %29 = vector.broadcast %28 : vector<8x1xf32> to vector<8x32xf32>
    %30 = arith.mulf %20, %29 : vector<8x32xf32>
    %c0_13 = arith.constant 0 : index
    %c0_14 = arith.constant 0 : index
    %31 = vector.load %arg4[%c0_13, %c0_14] : memref<1x32xf32, #tpu.memory_space<vmem>>, vector<1x32xf32>
    %32 = vector.broadcast %31 : vector<1x32xf32> to vector<8x32xf32>
    %33 = arith.mulf %32, %30 : vector<8x32xf32>
    %c0_15 = arith.constant 0 : index
    %c0_16 = arith.constant 0 : index
    %34 = vector.load %arg5[%c0_15, %c0_16] : memref<1x32xf32, #tpu.memory_space<vmem>>, vector<1x32xf32>
    %35 = vector.broadcast %34 : vector<1x32xf32> to vector<8x32xf32>
    %36 = arith.addf %33, %35 : vector<8x32xf32>
    %c0_17 = arith.constant 0 : index
    %c0_18 = arith.constant 0 : index
    %37 = vector.load %arg6[%c0_17, %c0_18] : memref<8x32xf32, #tpu.memory_space<vmem>>, vector<8x32xf32>
    tpu.vector_store %arg6[%c0_17, %c0_18], %36 {strides = array<i32>} : memref<8x32xf32, #tpu.memory_space<vmem>>, vector<8x32xf32>,
    return
  }
  func.func @transform_0(%arg0: i32) -> (i32, i32) {
    %c0_i32 = arith.constant 0 : i32
    %c0_i32_0 = arith.constant 0 : i32
    return %arg0, %c0_i32 : i32, i32
  }
  func.func @transform_1(%arg0: i32) -> (i32, i32) {
    %c0_i32 = arith.constant 0 : i32
    %c0_i32_0 = arith.constant 0 : i32
    %c0_i32_1 = arith.constant 0 : i32
    return %c0_i32, %c0_i32_0 : i32, i32
  }
  func.func @transform_2(%arg0: i32) -> (i32, i32) {
    %c0_i32 = arith.constant 0 : i32
    %c0_i32_0 = arith.constant 0 : i32
    %c0_i32_1 = arith.constant 0 : i32
    return %c0_i32, %c0_i32_0 : i32, i32
  }
  func.func @transform_3(%arg0: i32) -> (i32, i32) {
    %c0_i32 = arith.constant 0 : i32
    %c0_i32_0 = arith.constant 0 : i32
    %c0_i32_1 = arith.constant 0 : i32
    return %c0_i32, %c0_i32_0 : i32, i32
  }
  func.func @transform_4(%arg0: i32) -> (i32, i32) {
    %c0_i32 = arith.constant 0 : i32
    %c0_i32_0 = arith.constant 0 : i32
    %c0_i32_1 = arith.constant 0 : i32
    return %c0_i32, %c0_i32_0 : i32, i32
  }
  func.func @transform_5(%arg0: i32) -> (i32, i32) {
    %c0_i32 = arith.constant 0 : i32
    %c0_i32_0 = arith.constant 0 : i32
    return %arg0, %c0_i32 : i32, i32
  }
}

</mosaic_0001>

<llo_original>
// kernel: tpu_custom_call.1
$region0: #{tpu_custom_call.1}
  #allocation0 [shape = 'u32[]', space=smem, size = 0x4, offset = 0x4, fixed_abs, tag = 'smem constant byte address 0x4 - core index']
  #allocation1 [shape = 'u32[144,128]{1,0:T(1,128)}', space=vmem, size = 0x12000, scoped, tag = 'internal scratch']
  %s0 = inlined_call_operand.hbm [shape: f32[16,32], index: 0, kind: input, shape index: {}]
  %s1 = inlined_call_operand.hbm [shape: bf16[32,32], index: 1, kind: input, shape index: {}]
  %s2 = inlined_call_operand.vmem [shape: f32[1,32], index: 2, kind: input, shape index: {}]
  %s3 = inlined_call_operand.vmem [shape: f32[1,32], index: 3, kind: input, shape index: {}]
  %s4 = inlined_call_operand.vmem [shape: f32[1,32], index: 4, kind: input, shape index: {}]
  %s5 = inlined_call_operand.hbm [shape: f32[16,32], index: 5, kind: output, shape index: {}]
  %s6 = sld [smem:[#allocation0]]
  $region61: #{tpu_custom_call.1} parent=0
    _
  %s8 = ssub.s32 1, %s6
  %s9 = scalar_select 0, %s8, %s6
  $region1: #{tpu_custom_call.1} parent=0
    #allocation2 [shape = 'u8[8192]{0}', space=vmem, size = 0x2000, scoped, tag = 'input window, operand 0']
    #allocation3 [shape = 's32[2]{0}', space=sflag, size = 0x8, scoped, tag = 'scoped memory for tpu_custom_call.1']
    #allocation4 [shape = 's32[2]{0}', space=sflag, size = 0x8, scoped, tag = 'scoped memory for tpu_custom_call.1']
    #allocation5 [shape = 'u8[8192]{0}', space=vmem, size = 0x2000, scoped, tag = 'input window, operand 1, single buffered']
    #allocation6 [shape = 's32[1]{0}', space=sflag, size = 0x4, scoped, tag = 'scoped memory for tpu_custom_call.1']
    #allocation7 [shape = 'u8[8192]{0}', space=vmem, size = 0x2000, scoped, tag = 'output window, operand 0']
    %10 = vsyncpa [#allocation3], 0
    %s11 = scalar_lea.sflag [#allocation3], 1
    %12 = vsyncpa %s11, 0
    %13 = vsyncpa [#allocation6], 0
    %14 = vsyncpa [#allocation4], 0
    %s15 = scalar_lea.sflag [#allocation4], 1
    %16 = vsyncpa %s15, 0
    loop: start=0, step=1, limit=4
    $region2: #{tpu_custom_call.1} parent=1 // loop_pre_header
      _
    $region3: #{tpu_custom_call.1} parent=1 // loop_header
      %s18 = sphi 0, %s22
      %p19 = scmp.ge.s32.totalorder %s18, 4
      %s28 = sphi 0, %s30
      %s31 = sphi 0, %s28
      %s32 = sphi 0, %s31
      %s48 = sphi 0, %s32
      %s52 = sphi 0, %s52
      %s54 = sphi 0, %s52
      %s55 = sphi 0, %s54
      %s69 = sphi 0, %s55
      %s73 = sphi 0, %s73
      %s75 = sphi 0, %s73
      %s76 = sphi 0, %s75
      %s90 = sphi 0, %s76
      %s94 = sphi 0, %s94
      %s96 = sphi 0, %s94
      %s97 = sphi 0, %s96
      %s111 = sphi 0, %s97
      %s115 = sphi 0, %s115
      %s117 = sphi 0, %s115
      %s118 = sphi 0, %s117
      %s132 = sphi 0, %s118
      %s138 = sphi 0, %s140
      %s141 = sphi 0, %s138
      %s142 = sphi 0, %s141
      %s158 = sphi 0, %s142
    $region4: #{tpu_custom_call.1} parent=1 // loop_header_branch
      %21 = sbr.rel (%p19) target = $region8
    $region5: #{tpu_custom_call.1} parent=1 // loop_body
      %s23 = ssub.s32 %s18, 1
      %s24 = ssub.s32 %s18, 2
      %s25 = sadd.s32 %s18, 1
      %s26 = ssub.s32 %s18, %s25
      %p27 = scmp.eq.s32.totalorder %s26, 0
      %s29 = sadd.s32 %s28, 1
      %s30 = scalar_select %p27, %s28, %s29
      %p33 = pneg %p27
      %p34 = scmp.eq.s32.totalorder %s18, 1
      %p35 = por %p33, %p34
      %p36 = scmp.ne.s32.totalorder %s28, %s31
      %p37 = scmp.eq.s32.totalorder %s18, 0
      %p38 = por %p36, %p37
      %p39 = scmp.ne.s32.totalorder %s28, %s31
      %p40 = scmp.eq.s32.totalorder %s23, 1
      %p41 = por %p39, %p40
      %p42 = scmp.ne.s32.totalorder %s31, %s32
      %p43 = scmp.eq.s32.totalorder %s23, 0
      %p44 = por %p42, %p43
      %p45 = scmp.ne.s32.totalorder %s31, %s32
      %p46 = scmp.eq.s32.totalorder %s24, 1
      %p47 = por %p45, %p46
      %p49 = scmp.ne.s32.totalorder %s32, %s48
      %p50 = scmp.eq.s32.totalorder %s24, 0
      %p51 = por %p49, %p50
      %s53 = sadd.s32 %s52, 1
      %p56 = scmp.eq.s32.totalorder %s18, 1
      %p57 = scmp.ne.s32.totalorder %s52, %s54
      %p58 = scmp.eq.s32.totalorder %s18, 0
      %p59 = por %p57, %p58
      %p60 = scmp.ne.s32.totalorder %s52, %s54
      %p61 = scmp.eq.s32.totalorder %s23, 1
      %p62 = por %p60, %p61
      %p63 = scmp.ne.s32.totalorder %s54, %s55
      %p64 = scmp.eq.s32.totalorder %s23, 0
      %p65 = por %p63, %p64
      %p66 = scmp.ne.s32.totalorder %s54, %s55
      %p67 = scmp.eq.s32.totalorder %s24, 1
      %p68 = por %p66, %p67
      %p70 = scmp.ne.s32.totalorder %s55, %s69
      %p71 = scmp.eq.s32.totalorder %s24, 0
      %p72 = por %p70, %p71
      %s74 = sadd.s32 %s73, 1
      %p77 = scmp.eq.s32.totalorder %s18, 1
      %p78 = scmp.ne.s32.totalorder %s73, %s75
      %p79 = scmp.eq.s32.totalorder %s18, 0
      %p80 = por %p78, %p79
      %p81 = scmp.ne.s32.totalorder %s73, %s75
      %p82 = scmp.eq.s32.totalorder %s23, 1
      %p83 = por %p81, %p82
      %p84 = scmp.ne.s32.totalorder %s75, %s76
      %p85 = scmp.eq.s32.totalorder %s23, 0
      %p86 = por %p84, %p85
      %p87 = scmp.ne.s32.totalorder %s75, %s76
      %p88 = scmp.eq.s32.totalorder %s24, 1
      %p89 = por %p87, %p88
      %p91 = scmp.ne.s32.totalorder %s76, %s90
      %p92 = scmp.eq.s32.totalorder %s24, 0
      %p93 = por %p91, %p92
      %s95 = sadd.s32 %s94, 1
      %p98 = scmp.eq.s32.totalorder %s18, 1
      %p99 = scmp.ne.s32.totalorder %s94, %s96
      %p100 = scmp.eq.s32.totalorder %s18, 0
      %p101 = por %p99, %p100
      %p102 = scmp.ne.s32.totalorder %s94, %s96
      %p103 = scmp.eq.s32.totalorder %s23, 1
      %p104 = por %p102, %p103
      %p105 = scmp.ne.s32.totalorder %s96, %s97
      %p106 = scmp.eq.s32.totalorder %s23, 0
      %p107 = por %p105, %p106
      %p108 = scmp.ne.s32.totalorder %s96, %s97
      %p109 = scmp.eq.s32.totalorder %s24, 1
      %p110 = por %p108, %p109
      %p112 = scmp.ne.s32.totalorder %s97, %s111
      %p113 = scmp.eq.s32.totalorder %s24, 0
      %p114 = por %p112, %p113
      %s116 = sadd.s32 %s115, 1
      %p119 = scmp.eq.s32.totalorder %s18, 1
      %p120 = scmp.ne.s32.totalorder %s115, %s117
      %p121 = scmp.eq.s32.totalorder %s18, 0
      %p122 = por %p120, %p121
      %p123 = scmp.ne.s32.totalorder %s115, %s117
      %p124 = scmp.eq.s32.totalorder %s23, 1
      %p125 = por %p123, %p124
      %p126 = scmp.ne.s32.totalorder %s117, %s118
      %p127 = scmp.eq.s32.totalorder %s23, 0
      %p128 = por %p126, %p127
      %p129 = scmp.ne.s32.totalorder %s117, %s118
      %p130 = scmp.eq.s32.totalorder %s24, 1
      %p131 = por %p129, %p130
      %p133 = scmp.ne.s32.totalorder %s118, %s132
      %p134 = scmp.eq.s32.totalorder %s24, 0
      %p135 = por %p133, %p134
      %s136 = ssub.s32 %s18, %s25
      %p137 = scmp.eq.s32.totalorder %s136, 0
      %s139 = sadd.s32 %s138, 1
      %s140 = scalar_select %p137, %s138, %s139
      %p143 = pneg %p137
      %p144 = scmp.eq.s32.totalorder %s18, 1
      %p145 = por %p143, %p144
      %p146 = scmp.ne.s32.totalorder %s138, %s141
      %p147 = scmp.eq.s32.totalorder %s18, 0
      %p148 = por %p146, %p147
      %p149 = scmp.ne.s32.totalorder %s138, %s141
      %p150 = scmp.eq.s32.totalorder %s23, 1
      %p151 = por %p149, %p150
      %p152 = scmp.ne.s32.totalorder %s141, %s142
      %p153 = scmp.eq.s32.totalorder %s23, 0
      %p154 = por %p152, %p153
      %p155 = scmp.ne.s32.totalorder %s141, %s142
      %p156 = scmp.eq.s32.totalorder %s24, 1
      %p157 = por %p155, %p156
      %p159 = scmp.ne.s32.totalorder %s142, %s158
      %p160 = scmp.eq.s32.totalorder %s24, 0
      %p161 = por %p159, %p160
      %p162 = scmp.le.s32.totalorder 1, %s18
      %p163 = scmp.lt.s32.totalorder %s18, 3
      %p164 = pnand %p162, %p163
      %p165 = pneg %p164
      // Predicated region
      $region9: #{tpu_custom_call.1} parent=5 // pred_check
        _
      $region10: #{tpu_custom_call.1} parent=5 // pred_check_branch
        %167 = sbr.rel (%p164) target = $region12
      $region11: #{tpu_custom_call.1} parent=5 // pred_region
        %s168 = ssub.s32 %s18, 1
        // Predicated region
        $region13: #{tpu_custom_call.1} parent=11 // pred_check
          %p169 = pneg %p65
        $region14: #{tpu_custom_call.1} parent=11 // pred_check_branch
          %171 = sbr.rel (%p169) target = $region16
        $region15: #{tpu_custom_call.1} parent=11 // pred_region
          %s173 = ssub.s32 256, 256
          %174 = vsyncadd [#allocation6], %s173
          %s175 = sshll.u32 [#allocation5], 4
          %s176 = int_to_ptr.vmem [resolvable:$true] %s175
          %181 = dma.hbm_to_vmem [thread:$0]  %s1, 256, %s176, [#allocation6], 64, 64, 4
        $region16: #{tpu_custom_call.1} parent=11 // pred_fallthru
          _
        // Predicated region
        $region17: #{tpu_custom_call.1} parent=11 // pred_check
          %p182 = pneg %p86
        $region18: #{tpu_custom_call.1} parent=11 // pred_check_branch
          %184 = sbr.rel (%p182) target = $region20
        $region19: #{tpu_custom_call.1} parent=11 // pred_region
          _
        $region20: #{tpu_custom_call.1} parent=11 // pred_fallthru
          _
        // Predicated region
        $region21: #{tpu_custom_call.1} parent=11 // pred_check
          %p185 = pneg %p107
        $region22: #{tpu_custom_call.1} parent=11 // pred_check_branch
          %187 = sbr.rel (%p185) target = $region24
        $region23: #{tpu_custom_call.1} parent=11 // pred_region
          _
        $region24: #{tpu_custom_call.1} parent=11 // pred_fallthru
          _
        // Predicated region
        $region25: #{tpu_custom_call.1} parent=11 // pred_check
          %p188 = pneg %p128
        $region26: #{tpu_custom_call.1} parent=11 // pred_check_branch
          %190 = sbr.rel (%p188) target = $region28
        $region27: #{tpu_custom_call.1} parent=11 // pred_region
          _
        $region28: #{tpu_custom_call.1} parent=11 // pred_fallthru
          _
      $region12: #{tpu_custom_call.1} parent=5 // pred_fallthru
        _
      %p191 = scmp.lt.s32.totalorder %s18, 2
      // Predicated region
      $region29: #{tpu_custom_call.1} parent=5 // pred_check
        %p192 = pneg %p191
      $region30: #{tpu_custom_call.1} parent=5 // pred_check_branch
        %194 = sbr.rel (%p192) target = $region32
      $region31: #{tpu_custom_call.1} parent=5 // pred_region
        // Predicated region
        $region33: #{tpu_custom_call.1} parent=31 // pred_check
          %p195 = pneg %p38
        $region34: #{tpu_custom_call.1} parent=31 // pred_check_branch
          %197 = sbr.rel (%p195) target = $region36
        $region35: #{tpu_custom_call.1} parent=31 // pred_region
          %s198 = sand.u32 %s28, 1
          %s199 = scalar_lea.sflag [#allocation3], %s198
          %s200 = sand.u32 %s28, 1
          %s201 = smul.addr %s200, 8
          %s202 = scalar_lea.vmem [#allocation2], %s201
          %s204 = ssub.s32 128, 128
          %205 = vsyncadd %s199, %s204
          %s206 = smul.addr %s18, 128
          %s207 = scalar_lea.hbm %s0, %s206
          %s209 = sshll.u32 %s202, 4
          %s210 = int_to_ptr.vmem [resolvable:$true] %s209
          %212 = dma.hbm_to_vmem [thread:$0]  %s207, 128, %s210, %s199
        $region36: #{tpu_custom_call.1} parent=31 // pred_fallthru
          _
      $region32: #{tpu_custom_call.1} parent=5 // pred_fallthru
        _
      %p213 = scmp.le.s32.totalorder 1, %s18
      %p214 = scmp.lt.s32.totalorder %s18, 3
      %p215 = pnand %p213, %p214
      %p216 = pneg %p215
      // Predicated region
      $region37: #{tpu_custom_call.1} parent=5 // pred_check
        _
      $region38: #{tpu_custom_call.1} parent=5 // pred_check_branch
        %218 = sbr.rel (%p215) target = $region40
      $region39: #{tpu_custom_call.1} parent=5 // pred_region
        %s219 = ssub.s32 %s18, 1
        %s220 = sand.u32 %s31, 1
        %s221 = scalar_lea.sflag [#allocation3], %s220
        %s222 = sand.u32 %s31, 1
        %s223 = smul.addr %s222, 8
        %s224 = scalar_lea.vmem [#allocation2], %s223
        // Predicated region
        $region41: #{tpu_custom_call.1} parent=39 // pred_check
          %p225 = pneg %p44
        $region42: #{tpu_custom_call.1} parent=39 // pred_check_branch
          %227 = sbr.rel (%p225) target = $region44
        $region43: #{tpu_custom_call.1} parent=39 // pred_region
          %228 = dma.done %s221, 128
        $region44: #{tpu_custom_call.1} parent=39 // pred_fallthru
          _
        // Predicated region
        $region45: #{tpu_custom_call.1} parent=39 // pred_check
          %p229 = pneg %p65
        $region46: #{tpu_custom_call.1} parent=39 // pred_check_branch
          %231 = sbr.rel (%p229) target = $region48
        $region47: #{tpu_custom_call.1} parent=39 // pred_region
          %232 = dma.done [#allocation6], 256
        $region48: #{tpu_custom_call.1} parent=39 // pred_fallthru
          _
        %s233 = sand.u32 %s31, 1
        %s234 = scalar_lea.sflag [#allocation3], %s233
        %s235 = sand.u32 %s31, 1
        %s236 = smul.addr %s235, 8
        %s237 = scalar_lea.vmem [#allocation2], %s236
        %p238 = pneg %p44
        %p239 = pneg %p41
        %p240 = pneg %p65
        %p241 = pneg %p62
        %p242 = pneg %p86
        %p243 = pneg %p83
        %p244 = pneg %p107
        %p245 = pneg %p104
        %p246 = pneg %p128
        %p247 = pneg %p125
        %p248 = pneg %p154
        %p249 = pneg %p151
        %s250 = sand.u32 %s141, 1
        %s251 = scalar_lea.sflag [#allocation4], %s250
        %s252 = sand.u32 %s141, 1
        %s253 = smul.addr %s252, 8
        %s254 = scalar_lea.vmem [#allocation7], %s253
        %v256 = vld [vmem:[%s224] sm:$0xff]
        %v257 = vpack.c.bf16 %v256, %v256
        %v258 = vld [vmem:[#allocation5] sm:$0xf]
        %v259 = vld [vmem:[#allocation5 + $0x4] sm:$0xf]
        %v260 = vld [vmem:[#allocation5 + $0x8] sm:$0xf]
        %v261 = vld [vmem:[#allocation5 + $0xc] sm:$0xf]
        %v262 = vld [vmem:[%s2] sm:$0x1]
        %v264 = vlaneseq
        %v265 = vshrl.u32 %v264, 7
        %v266 = vsub.s32 0, %v265
        %v267 = vrot.slane %v262, %v266
        %v273 = vunpack.c.l.b16 %v258
        %v274 = vunpack.c.l.b16 %v259
        %v275 = vunpack.c.l.b16 %v260
        %v276 = vunpack.c.l.b16 %v261
        %v277 = vpack.c.b16 %v274, %v273
        %v278 = vpack.c.b16 %v276, %v275
        %vm281 = vcmask 261120
        %v283 = vsel %vm281, %v257, 0
        %285 = vmatprep.subr.bf16.mxu0 0
        %286 = vmatpush1.bf16.msra.mxu0 %v277
        %287 = vmatprep.subr.bf16.mxu0 0
        %288 = vmatpush1.bf16.msra.mxu0 %v278
        %289 = vmatprep.subr.bf16.mxu0 0
        %290 = vmatpush1.bf16.msra.mxu0 0
        %291 = vmatprep.subr.bf16.mxu0 0
        %292 = vmatpush1.bf16.msra.mxu0 0
        %293 = vmatprep.subr.bf16.mxu0 0
        %294 = vmatpush1.bf16.msra.mxu0 0
        %295 = vmatprep.subr.bf16.mxu0 0
        %296 = vmatpush1.bf16.msra.mxu0 0
        %297 = vmatprep.subr.bf16.mxu0 0
        %298 = vmatpush1.bf16.msra.mxu0 0
        %299 = vmatprep.subr.bf16.mxu0 0
        %300 = vmatpush1.bf16.msra.mxu0 0
        %301 = vmatprep.subr.bf16.mxu0 0
        %302 = vmatpush1.bf16.msra.mxu0 0
        %303 = vmatprep.subr.bf16.mxu0 0
        %304 = vmatpush1.bf16.msra.mxu0 0
        %305 = vmatprep.subr.bf16.mxu0 0
        %306 = vmatpush1.bf16.msra.mxu0 0
        %307 = vmatprep.subr.bf16.mxu0 0
        %308 = vmatpush1.bf16.msra.mxu0 0
        %309 = vmatprep.subr.bf16.mxu0 0
        %310 = vmatpush1.bf16.msra.mxu0 0
        %311 = vmatprep.subr.bf16.mxu0 0
        %312 = vmatpush1.bf16.msra.mxu0 0
        %313 = vmatprep.subr.bf16.mxu0 0
        %314 = vmatpush1.bf16.msra.mxu0 0
        %315 = vmatprep.subr.bf16.mxu0 0
        %316 = vmatpush1.bf16.msra.mxu0 0
        %317 = vmatprep.mubr.bf16.mxu0 0
        %318 = vmatmul.mubr.bf16.gmra.mrb[0].mxu0 %v283
        %v319 = vpop.f32.mrb[0].mxu0
        %v320 = vadd.f32 %v267, %v319
        %v321 = vpop.f32.mrb[0].mxu0
        %v322 = vpop.f32.mrb[0].mxu0
        %v323 = vpop.f32.mrb[0].mxu0
        %324 = vdwg.mxu0
        %v325 = vmul.f32 %v320, 0.5
        %v326 = vmul.f32 %v320, 0.70710677
        %v327 = verf.f32.pop %v326
        %v328 = vadd.f32 %v327, 1.0
        %v329 = vmul.f32 %v325, %v328
        %v330 = vsel %vm281, %v329, 0.0
        %331 = vadd.xlane.f32.xlu0 %v330
        %v332 = vpop.xlane.xlu0 %331
        %v333 = vrcp.pop 32.0
        %v334 = vmul.f32 %v332, %v333
        %v335 = vsub.f32 %v329, %v334
        %v336 = vmul.f32 %v335, %v335
        %v337 = vsel %vm281, %v336, 0.0
        %338 = vadd.xlane.f32.xlu0 %v337
        %v339 = vpop.xlane.xlu0 %338
        %v340 = vmul.f32 %v339, %v333
        %v341 = vadd.f32 %v340, 1e-12
        %v342 = vrsqrt.pop %v341
        %v343 = vmul.f32 %v335, %v342
        %v344 = vld [vmem:[%s3] sm:$0x1]
        %v346 = vlaneseq
        %v347 = vshrl.u32 %v346, 7
        %v348 = vsub.s32 0, %v347
        %v349 = vrot.slane %v344, %v348
        %v351 = vmul.f32 %v349, %v343
        %v352 = vld [vmem:[%s4] sm:$0x1]
        %v354 = vlaneseq
        %v355 = vshrl.u32 %v354, 7
        %v356 = vsub.s32 0, %v355
        %v357 = vrot.slane %v352, %v356
        %v359 = vadd.f32 %v351, %v357
        %360 = vst.msk [vmem:[%s254] sm:$0xff] %vm281, %v359
        %s361 = sand.u32 %s141, 1
        %s362 = scalar_lea.sflag [#allocation4], %s361
        %s363 = sand.u32 %s141, 1
        %s364 = smul.addr %s363, 8
        %s365 = scalar_lea.vmem [#allocation7], %s364
        // Predicated region
        $region49: #{tpu_custom_call.1} parent=39 // pred_check
          %p366 = pneg %p151
        $region50: #{tpu_custom_call.1} parent=39 // pred_check_branch
          %368 = sbr.rel (%p366) target = $region52
        $region51: #{tpu_custom_call.1} parent=39 // pred_region
          %s370 = ssub.s32 128, 128
          %371 = vsyncadd %s362, %s370
          %s372 = smul.addr %s23, 128
          %s373 = scalar_lea.hbm %s5, %s372
          %s375 = sshll.u32 %s365, 4
          %s376 = int_to_ptr.vmem [resolvable:$true] %s375
          %378 = dma.vmem_to_hbm [thread:$0]  %s376, 128, %s373, %s362
        $region52: #{tpu_custom_call.1} parent=39 // pred_fallthru
          _
      $region40: #{tpu_custom_call.1} parent=5 // pred_fallthru
        _
      %p379 = scmp.le.s32.totalorder 2, %s18
      // Predicated region
      $region53: #{tpu_custom_call.1} parent=5 // pred_check
        %p380 = pneg %p379
      $region54: #{tpu_custom_call.1} parent=5 // pred_check_branch
        %382 = sbr.rel (%p380) target = $region56
      $region55: #{tpu_custom_call.1} parent=5 // pred_region
        %s383 = ssub.s32 %s18, 2
        // Predicated region
        $region57: #{tpu_custom_call.1} parent=55 // pred_check
          %p384 = pneg %p157
        $region58: #{tpu_custom_call.1} parent=55 // pred_check_branch
          %386 = sbr.rel (%p384) target = $region60
        $region59: #{tpu_custom_call.1} parent=55 // pred_region
          %s387 = sand.u32 %s142, 1
          %s388 = scalar_lea.sflag [#allocation4], %s387
          %s389 = sand.u32 %s142, 1
          %s390 = smul.addr %s389, 8
          %s391 = scalar_lea.vmem [#allocation7], %s390
          %392 = dma.done %s388, 128
        $region60: #{tpu_custom_call.1} parent=55 // pred_fallthru
          _
      $region56: #{tpu_custom_call.1} parent=5 // pred_fallthru
        _
    $region6: #{tpu_custom_call.1} parent=1 // loop_footer
      %s22 = sadd.s32 1, %s18
    $region7: #{tpu_custom_call.1} parent=1 // loop_footer_branch
      %17 = sbr.rel target = $region3
    $region8: #{tpu_custom_call.1} parent=1 // loop_exit
      _
    %393 = vsyncpa [#allocation3], 1
    %s394 = scalar_lea.sflag [#allocation3], 1
    %395 = vsyncpa %s394, 1
    %396 = vsyncpa [#allocation6], 1
    %397 = vsyncpa [#allocation4], 1
    %s398 = scalar_lea.sflag [#allocation4], 1
    %399 = vsyncpa %s398, 1

</llo_original>
